<compile_context>
chip_gen: v5e
topology: v5e:2x2
jax: 0.10.0
libtpu: 0.0.40
codegen_flags: <defaults>
</compile_context>

<pallas_src>
import functools

import jax
import jax.numpy as jnp
from jax.experimental import pallas as pl
from jax.experimental.pallas import tpu as pltpu

_LANES = 128
# Per-input block of (4096, 128) f32 = 2 MiB; x2 inputs x2 pipeline buffers = 8 MiB.
_BLOCK_ROWS_MAX = 4096


def _bce_dice_partials_kernel(pr_ref, gt_ref, out_ref, *,
                              count, block_rows, needs_mask):
    """One (block_rows, 128) tile -> (1, 4, 128) lane-wise partial sums.

    out rows: [tp, sum_pr, sum_gt, sum_bce]. Only the sublane axis is reduced here
    (cheap VPU tree); cross-lane and cross-block reduction happen in the wrapper,
    keeping every grid step independent so the grid axis can be "parallel".
    """
    i = pl.program_id(0)

    x = pr_ref[...].astype(jnp.float32)   # logits
    y = gt_ref[...].astype(jnp.float32)   # targets

    # e = exp(-|x|) is shared by the stable sigmoid and the stable BCE-with-logits.
    e = jnp.exp(-jnp.abs(x))
    p = jnp.where(x >= 0, 1.0, e) / (1.0 + e)                  # sigmoid(x), stable
    bce = jnp.maximum(x, 0.0) - x * y + jnp.log1p(e)           # BCEWithLogits, stable

    if needs_mask:
        # Zero out lane-padding and any out-of-bounds rows of a partial last block.
        row_id = jax.lax.broadcasted_iota(jnp.int32, (block_rows, _LANES), 0)
        lane_id = jax.lax.broadcasted_iota(jnp.int32, (block_rows, _LANES), 1)
        flat_idx = i * (block_rows * _LANES) + row_id * _LANES + lane_id
        valid = flat_idx < count
        p = jnp.where(valid, p, 0.0)
        y = jnp.where(valid, y, 0.0)
        bce = jnp.where(valid, bce, 0.0)

    out_ref[0, 0:1, :] = jnp.sum(y * p, axis=0, keepdims=True)   # tp partial
    out_ref[0, 1:2, :] = jnp.sum(p, axis=0, keepdims=True)       # sum(pr) partial
    out_ref[0, 2:3, :] = jnp.sum(y, axis=0, keepdims=True)       # sum(gt) partial
    out_ref[0, 3:4, :] = jnp.sum(bce, axis=0, keepdims=True)     # sum(bce) partial


def bce_dice_loss(y_pr, y_gt, eps=1e-7, block_rows_max=_BLOCK_ROWS_MAX):
    """Equivalent of BCEDiceLoss()(y_pr, y_gt) -> scalar float32."""
    assert y_pr.shape == y_gt.shape
    total = int(y_pr.size)

    # Stream native dtypes; f32 math happens inside the kernel.
    flat_pr = y_pr.reshape(-1)
    flat_gt = y_gt.reshape(-1)

    # Pad only the ragged lane tail (no copy at all when total % 128 == 0).
    lane_pad = (-total) % _LANES
    if lane_pad:
        flat_pr = jnp.pad(flat_pr, (0, lane_pad))
        flat_gt = jnp.pad(flat_gt, (0, lane_pad))
    rows = (total + lane_pad) // _LANES

    pr2 = flat_pr.reshape(rows, _LANES)
    gt2 = flat_gt.reshape(rows, _LANES)

    # Small inputs: one full-array block (no grid loop). Large inputs: big tiles.
    block_rows = rows if rows <= block_rows_max else block_rows_max
    num_blocks = pl.cdiv(rows, block_rows)
    # Masking compiled in only when block coverage exceeds the true element count
    # (lane padding and/or a partial trailing block).
    needs_mask = (num_blocks * block_rows * _LANES) != total

    kernel = functools.partial(
        _bce_dice_partials_kernel,
        count=total, block_rows=block_rows, needs_mask=needs_mask,
    )

    blk = pl.BlockSpec((block_rows, _LANES), lambda i: (i, 0))

    parts = pl.pallas_call(
        kernel,
        out_shape=jax.ShapeDtypeStruct((num_blocks, 4, _LANES), jnp.float32),
        grid_spec=pltpu.PrefetchScalarGridSpec(
            num_scalar_prefetch=0,
            grid=(num_blocks,),
            in_specs=[blk, blk],
            out_specs=pl.BlockSpec((1, 4, _LANES), lambda i: (i, 0, 0)),
        ),
        compiler_params=pltpu.CompilerParams(
            # Every grid step is independent -> megacore can split it on v7x.
            dimension_semantics=("parallel",),
        ),
    )(pr2, gt2)

    # Tiny epilogue in plain XLA: combine lane/block partials and form the loss.
    sums = jnp.sum(parts, axis=(0, 2))            # [tp, sum_pr, sum_gt, sum_bce]
    tp, sum_pr, sum_gt, sum_bce = sums[0], sums[1], sums[2], sums[3]
    # f_score, beta=1: (2*tp+eps)/(2*tp+fn+fp+eps); fn=sum_gt-tp, fp=sum_pr-tp.
    score = (2.0 * tp + eps) / (sum_gt + sum_pr + eps)
    dice_loss = 1.0 - score
    bce_mean = sum_bce / jnp.float32(total)
    return dice_loss + bce_mean


def _reference_bce_dice(y_pr, y_gt, eps=1e-7):
    """Pure-JAX reference mirroring the PyTorch module, for sanity checking."""
    x = y_pr.astype(jnp.float32)
    y = y_gt.astype(jnp.float32)
    p = jax.nn.sigmoid(x)
    tp = jnp.sum(y * p)
    fp = jnp.sum(p) - tp
    fn = jnp.sum(y) - tp
    score = (2.0 * tp + eps) / (2.0 * tp + fn + fp + eps)
    dice_loss = 1.0 - score
    bce = jnp.mean(jnp.maximum(x, 0.0) - x * y + jnp.log1p(jnp.exp(-jnp.abs(x))))
    return dice_loss + bce


if __name__ == "__main__":
    key = jax.random.PRNGKey(0)
    k1, k2 = jax.random.split(key)
    # NCHW, matching the PyTorch convention for segmentation logits/masks.
    y_pr = jax.random.normal(k1, (2, 4, 16, 16), dtype=jnp.float32)            # logits
    y_gt = (jax.random.uniform(k2, (2, 4, 16, 16)) > 0.5).astype(jnp.float32)  # binary gt

    loss = jax.block_until_ready(bce_dice_loss(y_pr, y_gt))
    ref = _reference_bce_dice(y_pr, y_gt)
    assert jnp.allclose(loss, ref, rtol=1e-5, atol=1e-5), (loss, ref)

    # Extra coverage: ragged element count (lane-pad mask path) and a multi-block
    # "parallel" grid with a partial trailing block.
    k3, k4 = jax.random.split(k1)
    y_pr2 = jax.random.normal(k3, (2, 3, 15, 17), dtype=jnp.float32)
    y_gt2 = (jax.random.uniform(k4, (2, 3, 15, 17)) > 0.5).astype(jnp.float32)
    loss2 = jax.block_until_ready(bce_dice_loss(y_pr2, y_gt2, block_rows_max=8))
    ref2 = _reference_bce_dice(y_pr2, y_gt2)
    assert jnp.allclose(loss2, ref2, rtol=1e-5, atol=1e-5), (loss2, ref2)

    print("KERNEL_OK")
</pallas_src>

<mosaic_0001>
module attributes {stable_mosaic.version = 11 : i64} {
  func.func @_bce_dice_partials_kernel(%arg0: i32, %arg1: memref<16x128xf32, #tpu.memory_space<vmem>>, %arg2: memref<16x128xf32, #tpu.memory_space<vmem>>, %arg3: memref<1x4x128xf32, #tpu.memory_space<vmem>>) attributes {dimension_semantics = [#tpu.dimension_semantics<parallel>], iteration_bounds = array<i64: 1>, scalar_prefetch = 0 : i64, scratch_operands = 0 : i64, tpu.core_type = #tpu.core_type<tc>, window_params = [{transform_indices = @transform_0, window_bounds = array<i64: 16, 128>}, {transform_indices = @transform_1, window_bounds = array<i64: 16, 128>}, {transform_indices = @transform_2, window_bounds = array<i64: 1, 4, 128>}]} {
    %c0 = arith.constant 0 : index
    %c0_0 = arith.constant 0 : index
    %0 = vector.load %arg1[%c0, %c0_0] : memref<16x128xf32, #tpu.memory_space<vmem>>, vector<16x128xf32>
    %c0_1 = arith.constant 0 : index
    %c0_2 = arith.constant 0 : index
    %1 = vector.load %arg2[%c0_1, %c0_2] : memref<16x128xf32, #tpu.memory_space<vmem>>, vector<16x128xf32>
    %2 = math.absf %0 : vector<16x128xf32>
    %cst = arith.constant 0.000000e+00 : f32
    %3 = vector.broadcast %cst : f32 to vector<16x128xf32>
    %4 = arith.subf %3, %2 : vector<16x128xf32>
    %5 = math.exp %4 : vector<16x128xf32>
    %cst_3 = arith.constant 0.000000e+00 : f32
    %6 = vector.broadcast %cst_3 : f32 to vector<16x128xf32>
    %7 = arith.cmpf oge, %0, %6 : vector<16x128xf32>
    %cst_4 = arith.constant 1.000000e+00 : f32
    %8 = vector.broadcast %cst_4 : f32 to vector<16x128xf32>
    %9 = arith.select %7, %8, %5 : vector<16x128xi1>, vector<16x128xf32>
    %cst_5 = arith.constant 1.000000e+00 : f32
    %10 = vector.broadcast %cst_5 : f32 to vector<16x128xf32>
    %11 = arith.addf %10, %5 : vector<16x128xf32>
    %12 = arith.divf %9, %11 : vector<16x128xf32>
    %cst_6 = arith.constant 0.000000e+00 : f32
    %13 = vector.broadcast %cst_6 : f32 to vector<16x128xf32>
    %14 = arith.maximumf %0, %13 : vector<16x128xf32>
    %15 = arith.mulf %0, %1 : vector<16x128xf32>
    %16 = arith.subf %14, %15 : vector<16x128xf32>
    %17 = math.log1p %5 : vector<16x128xf32>
    %18 = arith.addf %16, %17 : vector<16x128xf32>
    %19 = arith.mulf %1, %12 : vector<16x128xf32>
    %cst_7 = arith.constant dense<0.000000e+00> : vector<128xf32>
    %20 = vector.multi_reduction <add>, %19, %cst_7 [0] : vector<16x128xf32> to vector<128xf32>
    %21 = vector.shape_cast %20 : vector<128xf32> to vector<1x128xf32>
    %c0_8 = arith.constant 0 : index
    %c0_9 = arith.constant 0 : index
    %c0_10 = arith.constant 0 : index
    %22 = vector.load %arg3[%c0_8, %c0_9, %c0_10] : memref<1x4x128xf32, #tpu.memory_space<vmem>>, vector<1x1x128xf32>
    %23 = vector.shape_cast %22 : vector<1x1x128xf32> to vector<1x128xf32>
    %24 = vector.shape_cast %21 : vector<1x128xf32> to vector<1x1x128xf32>
    tpu.vector_store %arg3[%c0_8, %c0_9, %c0_10], %24 {strides = array<i32>} : memref<1x4x128xf32, #tpu.memory_space<vmem>>, vector<1x1x128xf32>,
    %cst_11 = arith.constant dense<0.000000e+00> : vector<128xf32>
    %25 = vector.multi_reduction <add>, %12, %cst_11 [0] : vector<16x128xf32> to vector<128xf32>
    %26 = vector.shape_cast %25 : vector<128xf32> to vector<1x128xf32>
    %c0_12 = arith.constant 0 : index
    %c1 = arith.constant 1 : index
    %c0_13 = arith.constant 0 : index
    %27 = vector.load %arg3[%c0_12, %c1, %c0_13] : memref<1x4x128xf32, #tpu.memory_space<vmem>>, vector<1x1x128xf32>
    %28 = vector.shape_cast %27 : vector<1x1x128xf32> to vector<1x128xf32>
    %29 = vector.shape_cast %26 : vector<1x128xf32> to vector<1x1x128xf32>
    tpu.vector_store %arg3[%c0_12, %c1, %c0_13], %29 {strides = array<i32>} : memref<1x4x128xf32, #tpu.memory_space<vmem>>, vector<1x1x128xf32>,
    %cst_14 = arith.constant dense<0.000000e+00> : vector<128xf32>
    %30 = vector.multi_reduction <add>, %1, %cst_14 [0] : vector<16x128xf32> to vector<128xf32>
    %31 = vector.shape_cast %30 : vector<128xf32> to vector<1x128xf32>
    %c0_15 = arith.constant 0 : index
    %c2 = arith.constant 2 : index
    %c0_16 = arith.constant 0 : index
    %32 = vector.load %arg3[%c0_15, %c2, %c0_16] : memref<1x4x128xf32, #tpu.memory_space<vmem>>, vector<1x1x128xf32>
    %33 = vector.shape_cast %32 : vector<1x1x128xf32> to vector<1x128xf32>
    %34 = vector.shape_cast %31 : vector<1x128xf32> to vector<1x1x128xf32>
    tpu.vector_store %arg3[%c0_15, %c2, %c0_16], %34 {strides = array<i32>} : memref<1x4x128xf32, #tpu.memory_space<vmem>>, vector<1x1x128xf32>,
    %cst_17 = arith.constant dense<0.000000e+00> : vector<128xf32>
    %35 = vector.multi_reduction <add>, %18, %cst_17 [0] : vector<16x128xf32> to vector<128xf32>
    %36 = vector.shape_cast %35 : vector<128xf32> to vector<1x128xf32>
    %c0_18 = arith.constant 0 : index
    %c3 = arith.constant 3 : index
    %c0_19 = arith.constant 0 : index
    %37 = vector.load %arg3[%c0_18, %c3, %c0_19] : memref<1x4x128xf32, #tpu.memory_space<vmem>>, vector<1x1x128xf32>
    %38 = vector.shape_cast %37 : vector<1x1x128xf32> to vector<1x128xf32>
    %39 = vector.shape_cast %36 : vector<1x128xf32> to vector<1x1x128xf32>
    tpu.vector_store %arg3[%c0_18, %c3, %c0_19], %39 {strides = array<i32>} : memref<1x4x128xf32, #tpu.memory_space<vmem>>, vector<1x1x128xf32>,
    return
  }
  func.func @transform_0(%arg0: i32) -> (i32, i32) {
    %c0_i32 = arith.constant 0 : i32
    %c0_i32_0 = arith.constant 0 : i32
    return %arg0, %c0_i32 : i32, i32
  }
  func.func @transform_1(%arg0: i32) -> (i32, i32) {
    %c0_i32 = arith.constant 0 : i32
    %c0_i32_0 = arith.constant 0 : i32
    return %arg0, %c0_i32 : i32, i32
  }
  func.func @transform_2(%arg0: i32) -> (i32, i32, i32) {
    %c0_i32 = arith.constant 0 : i32
    %c0_i32_0 = arith.constant 0 : i32
    %c0_i32_1 = arith.constant 0 : i32
    return %arg0, %c0_i32, %c0_i32_0 : i32, i32, i32
  }
}

</mosaic_0001>

<llo_original>
// kernel: tpu_custom_call.1
$region0: #{tpu_custom_call.1}
  #allocation0 [shape = 'u32[]', space=smem, size = 0x4, offset = 0x4, fixed_abs, tag = 'smem constant byte address 0x4 - core index']
  #allocation1 [shape = 'u32[72,128]{1,0:T(1,128)}', space=vmem, size = 0x9000, scoped, tag = 'internal scratch']
  %s0 = inlined_call_operand.hbm [shape: f32[16,128], index: 0, kind: input, shape index: {}]
  %s1 = inlined_call_operand.hbm [shape: f32[16,128], index: 1, kind: input, shape index: {}]
  %s2 = inlined_call_operand.hbm [shape: f32[1,4,128], index: 2, kind: output, shape index: {}]
  %s3 = sld [smem:[#allocation0]]
  $region26: #{tpu_custom_call.1} parent=0
    _
  %s5 = ssub.s32 1, %s3
  %s6 = scalar_select 0, %s5, %s3
  $region1: #{tpu_custom_call.1} parent=0
    #allocation2 [shape = 'u8[8192]{0}', space=vmem, size = 0x2000, scoped, tag = 'input window, operand 0, single buffered']
    #allocation3 [shape = 's32[1]{0}', space=sflag, size = 0x4, scoped, tag = 'scoped memory for tpu_custom_call.1']
    #allocation4 [shape = 's32[1]{0}', space=sflag, size = 0x4, scoped, tag = 'scoped memory for tpu_custom_call.1']
    #allocation5 [shape = 'u8[8192]{0}', space=vmem, size = 0x2000, scoped, tag = 'input window, operand 1, single buffered']
    #allocation6 [shape = 's32[1]{0}', space=sflag, size = 0x4, scoped, tag = 'scoped memory for tpu_custom_call.1']
    #allocation7 [shape = 'u8[2048]{0}', space=vmem, size = 0x800, scoped, tag = 'output window, operand 0, single buffered']
    %7 = vsyncpa [#allocation3], 0
    %8 = vsyncpa [#allocation6], 0
    %9 = vsyncpa [#allocation4], 0
    // Predicated region
    $region2: #{tpu_custom_call.1} parent=1 // pred_check
      _
    $region3: #{tpu_custom_call.1} parent=1 // pred_check_branch
      %11 = sbr.rel (0) target = $region5
    $region4: #{tpu_custom_call.1} parent=1 // pred_region
      %13 = vsyncadd [#allocation3], 0
      %s14 = sshll.u32 %s0, 4
      %s15 = int_to_ptr.hbm [resolvable:$true] %s14
      %s16 = sshll.u32 [#allocation2], 4
      %s17 = int_to_ptr.vmem [resolvable:$true] %s16
      %22 = dma.hbm_to_vmem [thread:$0]  %s15, 256, %s17, [#allocation3], 128, 128, 8
    $region5: #{tpu_custom_call.1} parent=1 // pred_fallthru
      _
    // Predicated region
    $region6: #{tpu_custom_call.1} parent=1 // pred_check
      _
    $region7: #{tpu_custom_call.1} parent=1 // pred_check_branch
      %24 = sbr.rel (0) target = $region9
    $region8: #{tpu_custom_call.1} parent=1 // pred_region
      %26 = vsyncadd [#allocation6], 0
      %s27 = sshll.u32 %s1, 4
      %s28 = int_to_ptr.hbm [resolvable:$true] %s27
      %s29 = sshll.u32 [#allocation5], 4
      %s30 = int_to_ptr.vmem [resolvable:$true] %s29
      %35 = dma.hbm_to_vmem [thread:$0]  %s28, 256, %s30, [#allocation6], 128, 128, 8
    $region9: #{tpu_custom_call.1} parent=1 // pred_fallthru
      _
    // Predicated region
    $region10: #{tpu_custom_call.1} parent=1 // pred_check
      _
    $region11: #{tpu_custom_call.1} parent=1 // pred_check_branch
      %37 = sbr.rel (0) target = $region13
    $region12: #{tpu_custom_call.1} parent=1 // pred_region
      %39 = dma.done [#allocation3], 256
    $region13: #{tpu_custom_call.1} parent=1 // pred_fallthru
      _
    // Predicated region
    $region14: #{tpu_custom_call.1} parent=1 // pred_check
      _
    $region15: #{tpu_custom_call.1} parent=1 // pred_check_branch
      %41 = sbr.rel (0) target = $region17
    $region16: #{tpu_custom_call.1} parent=1 // pred_region
      %43 = dma.done [#allocation6], 256
    $region17: #{tpu_custom_call.1} parent=1 // pred_fallthru
      _
    %v44 = vld [vmem:[#allocation2] sm:$0xff]
    %v45 = vld [vmem:[#allocation2 + $0x8] sm:$0xff]
    %v46 = vld [vmem:[#allocation5] sm:$0xff]
    %v47 = vld [vmem:[#allocation5 + $0x8] sm:$0xff]
    %v48 = vand.u32 2147483647, %v44
    %v49 = vand.u32 2147483647, %v45
    %v50 = vsub.f32 0.0, %v48
    %v51 = vsub.f32 0.0, %v49
    %v52 = vmul.f32 %v50, 1.442695
    %v53 = vpow.pop %v52
    %v54 = vmul.f32 %v51, 1.442695
    %v55 = vpow.pop %v54
    %vm56 = vcmp.ge.f32.partialorder %v44, 0.0
    %vm57 = vcmp.ge.f32.partialorder %v45, 0.0
    %v58 = vsel %vm56, 1.0, %v53
    %v59 = vsel %vm57, 1.0, %v55
    %v60 = vadd.f32 %v53, 1.0
    %v61 = vadd.f32 %v55, 1.0
    %v62 = vrcp.pop %v60
    %v63 = vmul.f32 %v60, %v62
    %v64 = vsub.f32 1.0, %v63
    %v65 = vmul.f32 %v62, %v64
    %v66 = vadd.f32 %v62, %v65
    %vm67 = vweird.f32 %v60
    %vm68 = vweird.f32 %v62
    %vm69 = vmor %vm67, %vm68
    %v70 = vsel %vm69, %v62, %v66
    %v71 = vand.u32 2147483647, %v60
    %vm72 = vcmp.eq.f32.partialorder %v71, 8.507059e+37
    %v73 = vand.u32 %v60, 2147483648
    %v74 = vor.u32 1.1754944e-38, %v73
    %v75 = vsel %vm72, %v74, %v70
    %v76 = vmul.f32 %v58, %v75
    %v77 = vrcp.pop %v61
    %v78 = vmul.f32 %v61, %v77
    %v79 = vsub.f32 1.0, %v78
    %v80 = vmul.f32 %v77, %v79
    %v81 = vadd.f32 %v77, %v80
    %vm82 = vweird.f32 %v61
    %vm83 = vweird.f32 %v77
    %vm84 = vmor %vm82, %vm83
    %v85 = vsel %vm84, %v77, %v81
    %v86 = vand.u32 2147483647, %v61
    %vm87 = vcmp.eq.f32.partialorder %v86, 8.507059e+37
    %v88 = vand.u32 %v61, 2147483648
    %v89 = vor.u32 1.1754944e-38, %v88
    %v90 = vsel %vm87, %v89, %v85
    %v91 = vmul.f32 %v59, %v90
    %v92 = vmax.f32 %v44, 0.0
    %v93 = vmax.f32 %v45, 0.0
    %v94 = vmul.f32 %v44, %v46
    %v95 = vmul.f32 %v45, %v47
    %v96 = vsub.f32 %v92, %v94
    %v97 = vsub.f32 %v93, %v95
    %v98 = vadd.f32 %v53, 1.0
    %v99 = vlog2.pop %v98
    %v100 = vmul.f32 %v99, 0.6931472
    %v101 = vmul.f32 -0.5, %v53
    %v102 = vadd.f32 %v101, 1.0
    %v103 = vmul.f32 %v102, %v53
    %v104 = vand.u32 2147483647, %v53
    %vm105 = vcmp.lt.f32.partialorder %v104, 0.0004427343
    %v106 = vsel %vm105, %v103, %v100
    %v107 = vadd.f32 %v55, 1.0
    %v108 = vlog2.pop %v107
    %v109 = vmul.f32 %v108, 0.6931472
    %v110 = vmul.f32 -0.5, %v55
    %v111 = vadd.f32 %v110, 1.0
    %v112 = vmul.f32 %v111, %v55
    %v113 = vand.u32 2147483647, %v55
    %vm114 = vcmp.lt.f32.partialorder %v113, 0.0004427343
    %v115 = vsel %vm114, %v112, %v109
    %v116 = vadd.f32 %v96, %v106
    %v117 = vadd.f32 %v97, %v115
    %v118 = vmul.f32 %v46, %v76
    %v119 = vmul.f32 %v47, %v91
    %v120 = vadd.f32 %v118, %v119
    %v121 = vrot.slane %v120, 4
    %v122 = vadd.f32 %v120, %v121
    %v123 = vrot.slane %v122, 2
    %v124 = vadd.f32 %v122, %v123
    %v125 = vrot.slane %v124, 1
    %v126 = vadd.f32 %v124, %v125
    %127 = vst [vmem:[#allocation7] sm:$0x1] %v126
    %v128 = vadd.f32 %v76, %v91
    %v129 = vrot.slane %v128, 4
    %v130 = vadd.f32 %v128, %v129
    %v131 = vrot.slane %v130, 2
    %v132 = vadd.f32 %v130, %v131
    %v133 = vrot.slane %v132, 1
    %v134 = vadd.f32 %v132, %v133
    %135 = vst [vmem:[#allocation7 + $0x1] sm:$0x1] %v134
    %v136 = vadd.f32 %v46, %v47
    %v137 = vrot.slane %v136, 4
    %v138 = vadd.f32 %v136, %v137
    %v139 = vrot.slane %v138, 2
    %v140 = vadd.f32 %v138, %v139
    %v141 = vrot.slane %v140, 1
    %v142 = vadd.f32 %v140, %v141
    %143 = vst [vmem:[#allocation7 + $0x2] sm:$0x1] %v142
    %v144 = vadd.f32 %v116, %v117
    %v145 = vrot.slane %v144, 4
    %v146 = vadd.f32 %v144, %v145
    %v147 = vrot.slane %v146, 2
    %v148 = vadd.f32 %v146, %v147
    %v149 = vrot.slane %v148, 1
    %v150 = vadd.f32 %v148, %v149
    %151 = vst [vmem:[#allocation7 + $0x3] sm:$0x1] %v150
    // Predicated region
    $region18: #{tpu_custom_call.1} parent=1 // pred_check
      _
    $region19: #{tpu_custom_call.1} parent=1 // pred_check_branch
      %153 = sbr.rel (0) target = $region21
    $region20: #{tpu_custom_call.1} parent=1 // pred_region
      %155 = vsyncadd [#allocation4], 0
      %s157 = sshll.u32 [#allocation7], 4
      %s158 = int_to_ptr.vmem [resolvable:$true] %s157
      %s159 = sshll.u32 %s2, 4
      %s160 = int_to_ptr.hbm [resolvable:$true] %s159
      %162 = dma.vmem_to_hbm [thread:$0]  %s158, 64, %s160, [#allocation4]
    $region21: #{tpu_custom_call.1} parent=1 // pred_fallthru
      _
    // Predicated region
    $region22: #{tpu_custom_call.1} parent=1 // pred_check
      _
    $region23: #{tpu_custom_call.1} parent=1 // pred_check_branch
      %164 = sbr.rel (0) target = $region25
    $region24: #{tpu_custom_call.1} parent=1 // pred_region
      %166 = dma.done [#allocation4], 64
    $region25: #{tpu_custom_call.1} parent=1 // pred_fallthru
      _
    %167 = vsyncpa [#allocation3], 1
    %168 = vsyncpa [#allocation6], 1
    %169 = vsyncpa [#allocation4], 1

</llo_original>
